<compile_context>
chip_gen: v7x
topology: tpu7x:2x2x1
jax: 0.10.0
libtpu: 0.0.40
codegen_flags: <defaults>
</compile_context>

<pallas_src>
import jax
import jax.numpy as jnp
from jax.experimental import pallas as pl
from jax.experimental.pallas import tpu as pltpu

LN_EPS = 1e-5                    # nn.LayerNorm default
_RSQRT_EPS = LN_EPS ** -0.5      # compile-time constant: 1/sqrt(0 + eps)
LANES = 128                      # lane width of a vreg
DEFAULT_TILE_ROWS = 512          # 512 x 128 f32 = 256 KiB per buffer


def fused_fc_ln_feat1_kernel(s_ref, x_ref, o_ref):
    """Fused Linear(1,1) + LayerNorm(1), lane-dense elementwise form.

    s_ref: SMEM (4,) f32 = [w, b, gamma, beta]
    x_ref/o_ref: VMEM (tile_rows, 128) f32 tiles of the flattened input.
    """
    w = s_ref[0]
    b = s_ref[1]
    gamma = s_ref[2]
    beta = s_ref[3]

    x = x_ref[...]
    y = x * w + b                         # Linear(1, 1) per element

    # LayerNorm over a size-1 feature dim: mean == y, var == 0, so
    #   out = (y - mean) * rsqrt(var + eps) * gamma + beta
    #       = (y - y) * rsqrt(eps) * gamma + beta        (== beta for finite y)
    # Keeping (y - y) preserves NaN/Inf propagation exactly like PyTorch,
    # while avoiding any cross-lane reduction or in-kernel transcendental.
    o_ref[...] = (y - y) * (gamma * _RSQRT_EPS) + beta


def example_forward(x, w, b, gamma, beta, *, tile_rows=DEFAULT_TILE_ROWS):
    """x: (..., 1) float32. Returns LayerNorm(Linear(x)) with the same shape."""
    orig_shape = x.shape
    assert orig_shape[-1] == 1, "module is Linear(1,1)+LayerNorm(1): feat must be 1"

    # Flatten to a lane-dense (rows, 128) view; pad the tail with zeros.
    flat = x.reshape(-1).astype(jnp.float32)
    n = flat.shape[0]
    rows = pl.cdiv(n, LANES)
    padded = rows * LANES
    if padded != n:
        flat = jnp.pad(flat, (0, padded - n))
    x2d = flat.reshape(rows, LANES)

    # Pick a tile that satisfies the (8, 128) block rule: either divisible by
    # 8 (DEFAULT_TILE_ROWS is) or equal to the full row extent.
    trows = min(tile_rows, rows)
    grid = (pl.cdiv(rows, trows),)

    # All four scalars packed into one tiny 1-D SMEM array (one scalar DMA).
    scalars = jnp.array([w, b, gamma, beta], dtype=jnp.float32)

    out2d = pl.pallas_call(
        fused_fc_ln_feat1_kernel,
        out_shape=jax.ShapeDtypeStruct((rows, LANES), jnp.float32),
        grid=grid,
        in_specs=[
            pl.BlockSpec(memory_space=pltpu.MemorySpace.SMEM),
            pl.BlockSpec((trows, LANES), lambda i: (i, 0)),
        ],
        out_specs=pl.BlockSpec((trows, LANES), lambda i: (i, 0)),
        compiler_params=pltpu.CompilerParams(
            dimension_semantics=("parallel",),
        ),
    )(scalars, x2d)

    return out2d.reshape(-1)[:n].reshape(orig_shape)


if __name__ == "__main__":
    key = jax.random.PRNGKey(0)
    # Small shape consistent with the module: (batch=2, seq=16, features=1)
    x = jax.random.normal(key, (2, 16, 1), dtype=jnp.float32)

    # Deterministic parameters (Linear(1,1): weight (1,1), bias (1);
    # LayerNorm(1): weight (1,), bias (1,)).
    w = 0.5       # fc1.weight[0, 0]
    b = 0.1       # fc1.bias[0]
    gamma = 1.3   # norm1.weight[0]
    beta = 0.25   # norm1.bias[0]

    out = example_forward(x, w, b, gamma, beta)
    out = jax.block_until_ready(out)

    # Reference check in plain JAX (full LayerNorm formula).
    y = x * w + b
    mean = jnp.mean(y, axis=-1, keepdims=True)
    var = jnp.mean((y - mean) ** 2, axis=-1, keepdims=True)
    ref = (y - mean) * jax.lax.rsqrt(var + LN_EPS) * gamma + beta
    assert out.shape == x.shape, "shape mismatch"
    assert jnp.allclose(out, ref, atol=1e-6), "mismatch vs reference"

    print("KERNEL_OK")
</pallas_src>

<mosaic_0001>
module attributes {stable_mosaic.version = 11 : i64} {
  func.func @fused_fc_ln_feat1_kernel(%arg0: i32, %arg1: memref<4xf32, #tpu.memory_space<smem>>, %arg2: memref<1x128xf32, #tpu.memory_space<vmem>>, %arg3: memref<1x128xf32, #tpu.memory_space<vmem>>) attributes {dimension_semantics = [#tpu.dimension_semantics<parallel>], iteration_bounds = array<i64: 1>, scalar_prefetch = 0 : i64, scratch_operands = 0 : i64, tpu.core_type = #tpu.core_type<tc>, window_params = [{transform_indices = @transform_0, window_bounds = array<i64: 4>}, {transform_indices = @transform_1, window_bounds = array<i64: 1, 128>}, {transform_indices = @transform_2, window_bounds = array<i64: 1, 128>}]} {
    %c0 = arith.constant 0 : index
    %0 = memref.load %arg1[%c0] : memref<4xf32, #tpu.memory_space<smem>>
    %c1 = arith.constant 1 : index
    %1 = memref.load %arg1[%c1] : memref<4xf32, #tpu.memory_space<smem>>
    %c2 = arith.constant 2 : index
    %2 = memref.load %arg1[%c2] : memref<4xf32, #tpu.memory_space<smem>>
    %c3 = arith.constant 3 : index
    %3 = memref.load %arg1[%c3] : memref<4xf32, #tpu.memory_space<smem>>
    %c0_0 = arith.constant 0 : index
    %c0_1 = arith.constant 0 : index
    %4 = vector.load %arg2[%c0_0, %c0_1] : memref<1x128xf32, #tpu.memory_space<vmem>>, vector<1x128xf32>
    %5 = vector.broadcast %0 : f32 to vector<1x128xf32>
    %6 = arith.mulf %4, %5 : vector<1x128xf32>
    %7 = vector.broadcast %1 : f32 to vector<1x128xf32>
    %8 = arith.addf %6, %7 : vector<1x128xf32>
    %9 = arith.subf %8, %8 : vector<1x128xf32>
    %cst = arith.constant 316.227753 : f32
    %10 = arith.mulf %2, %cst : f32
    %11 = vector.broadcast %10 : f32 to vector<1x128xf32>
    %12 = arith.mulf %9, %11 : vector<1x128xf32>
    %13 = vector.broadcast %3 : f32 to vector<1x128xf32>
    %14 = arith.addf %12, %13 : vector<1x128xf32>
    %c0_2 = arith.constant 0 : index
    %c0_3 = arith.constant 0 : index
    %15 = vector.load %arg3[%c0_2, %c0_3] : memref<1x128xf32, #tpu.memory_space<vmem>>, vector<1x128xf32>
    tpu.vector_store %arg3[%c0_2, %c0_3], %14 {strides = array<i32>} : memref<1x128xf32, #tpu.memory_space<vmem>>, vector<1x128xf32>,
    return
  }
  func.func @transform_0(%arg0: i32) -> i32 {
    %c0_i32 = arith.constant 0 : i32
    %c0_i32_0 = arith.constant 0 : i32
    return %c0_i32 : i32
  }
  func.func @transform_1(%arg0: i32) -> (i32, i32) {
    %c0_i32 = arith.constant 0 : i32
    %c0_i32_0 = arith.constant 0 : i32
    return %arg0, %c0_i32 : i32, i32
  }
  func.func @transform_2(%arg0: i32) -> (i32, i32) {
    %c0_i32 = arith.constant 0 : i32
    %c0_i32_0 = arith.constant 0 : i32
    return %arg0, %c0_i32 : i32, i32
  }
}

</mosaic_0001>

<llo_original>
// kernel: tpu_custom_call.1
$region0: #{tpu_custom_call.1}
  #allocation0 [shape = 'u32[]', space=smem, size = 0x4, offset = 0x4, fixed_abs, tag = 'smem constant byte address 0x4 - core index']
  #allocation1 [shape = 'u32[144,128]{1,0:T(1,128)}', space=vmem, size = 0x12000, scoped, tag = 'internal scratch']
  %s0 = inlined_call_operand.hbm [shape: f32[4], index: 0, kind: input, shape index: {}]
  %s1 = inlined_call_operand.vmem [shape: f32[1,128], index: 1, kind: input, shape index: {}]
  %s2 = inlined_call_operand.hbm [shape: f32[1,128], index: 2, kind: output, shape index: {}]
  %s3 = sld [smem:[#allocation0]]
  $region22: #{tpu_custom_call.1} parent=0
    _
  %s5 = ssub.s32 1, %s3
  %s6 = scalar_select 0, %s5, %s3
  $region1: #{tpu_custom_call.1} parent=0
    #allocation2 [shape = 'u8[512]{0}', space=smem, size = 0x200, scoped, tag = 'input window, operand 0, single buffered']
    #allocation3 [shape = 's32[1]{0}', space=sflag, size = 0x4, scoped, tag = 'scoped memory for tpu_custom_call.1']
    #allocation4 [shape = 's32[1]{0}', space=sflag, size = 0x4, scoped, tag = 'scoped memory for tpu_custom_call.1']
    #allocation5 [shape = 'u8[512]{0}', space=vmem, size = 0x400, scoped, tag = 'output window, operand 0, single buffered']
    %7 = vsyncpa [#allocation4], 0
    %8 = vsyncpa [#allocation3], 0
    // Predicated region
    $region2: #{tpu_custom_call.1} parent=1 // pred_check
      _
    $region3: #{tpu_custom_call.1} parent=1 // pred_check_branch
      %10 = sbr.rel (0) target = $region5
    $region4: #{tpu_custom_call.1} parent=1 // pred_region
      %s12 = ssub.s32 16, 16
      %13 = vsyncadd [#allocation4], %s12
      %16 = dma.hbm_to_smem %s0, 16, [#allocation2], [#allocation4]
    $region5: #{tpu_custom_call.1} parent=1 // pred_fallthru
      _
    // Predicated region
    $region6: #{tpu_custom_call.1} parent=1 // pred_check
      _
    $region7: #{tpu_custom_call.1} parent=1 // pred_check_branch
      %18 = sbr.rel (0) target = $region9
    $region8: #{tpu_custom_call.1} parent=1 // pred_region
      _
    $region9: #{tpu_custom_call.1} parent=1 // pred_fallthru
      _
    // Predicated region
    $region10: #{tpu_custom_call.1} parent=1 // pred_check
      _
    $region11: #{tpu_custom_call.1} parent=1 // pred_check_branch
      %20 = sbr.rel (0) target = $region13
    $region12: #{tpu_custom_call.1} parent=1 // pred_region
      %21 = dma.done [#allocation4], 16
    $region13: #{tpu_custom_call.1} parent=1 // pred_fallthru
      _
    %22 = sfence
    %s23 = sld [smem:[#allocation2]]
    %s24 = sld [smem:[#allocation2 + $0x1]]
    %s25 = sld [smem:[#allocation2 + $0x2]]
    %s26 = sld [smem:[#allocation2 + $0x3]]
    %v27 = vld [vmem:[%s1] sm:$0x1]
    %v28 = vstv %s23
    %v29 = vmul.f32 %v27, %v28
    %v30 = vstv %s24
    %v31 = vadd.f32 %v29, %v30
    %v32 = vsub.f32 %v31, %v31
    %s33 = smul.f32 %s25, 316.22775
    %v34 = vstv %s33
    %v35 = vmul.f32 %v32, %v34
    %v36 = vstv %s26
    %v37 = vadd.f32 %v35, %v36
    %38 = vst [vmem:[#allocation5] sm:$0x1] %v37
    // Predicated region
    $region14: #{tpu_custom_call.1} parent=1 // pred_check
      _
    $region15: #{tpu_custom_call.1} parent=1 // pred_check_branch
      %40 = sbr.rel (0) target = $region17
    $region16: #{tpu_custom_call.1} parent=1 // pred_region
      %s42 = ssub.s32 16, 16
      %43 = vsyncadd [#allocation3], %s42
      %s45 = sshll.u32 [#allocation5], 4
      %s46 = int_to_ptr.vmem [resolvable:$true] %s45
      %48 = dma.vmem_to_hbm [thread:$0]  %s46, 16, %s2, [#allocation3]
    $region17: #{tpu_custom_call.1} parent=1 // pred_fallthru
      _
    // Predicated region
    $region18: #{tpu_custom_call.1} parent=1 // pred_check
      _
    $region19: #{tpu_custom_call.1} parent=1 // pred_check_branch
      %50 = sbr.rel (0) target = $region21
    $region20: #{tpu_custom_call.1} parent=1 // pred_region
      %51 = dma.done [#allocation3], 16
    $region21: #{tpu_custom_call.1} parent=1 // pred_fallthru
      _
    %52 = vsyncpa [#allocation3], 1
    %53 = vsyncpa [#allocation4], 1

</llo_original>
